<compile_context>
chip_gen: v5e
topology: v5e:2x2
jax: 0.10.0
libtpu: 0.0.40
codegen_flags: <defaults>
</compile_context>

<pallas_src>
import functools
import math

import jax
import jax.numpy as jnp
from jax.experimental import pallas as pl
from jax.experimental.pallas import tpu as pltpu


def _mha_kernel(head_dim,
                q_ref, k_ref, v_ref,
                wq_ref, wk_ref, wv_ref,
                bq_ref, bk_ref, bv_ref,
                wo_ref, bo_ref,
                o_ref,
                qh_ref, m_ref, l_ref, acc_ref, oacc_ref):
    """Grid step = (batch b, head h, kv tile): online-softmax attention for one head,
    accumulating the out-projection across heads into a VMEM scratch."""
    h = pl.program_id(1)
    kv = pl.program_id(2)
    nheads = pl.num_programs(1)
    n_kv = pl.num_programs(2)
    scale = 1.0 / math.sqrt(head_dim)

    # Reset the out-projection accumulator at the start of each batch element.
    @pl.when(jnp.logical_and(h == 0, kv == 0))
    def _():
        oacc_ref[...] = jnp.zeros_like(oacc_ref)

    # Project Q for this (batch, head) once per head (fold in 1/sqrt(hd)); init online softmax.
    @pl.when(kv == 0)
    def _():
        xq = q_ref[0].astype(jnp.bfloat16)                                  # (S, D)
        qh = jnp.dot(xq, wq_ref[0], preferred_element_type=jnp.float32)     # (S, hd) f32
        qh = (qh + bq_ref[0]) * scale
        qh_ref[...] = qh.astype(jnp.bfloat16)
        m_ref[...] = jnp.full_like(m_ref, -jnp.inf)
        l_ref[...] = jnp.zeros_like(l_ref)
        acc_ref[...] = jnp.zeros_like(acc_ref)

    # Project this KV tile for this head (bf16 MXU, f32 accumulate).
    xk = k_ref[0].astype(jnp.bfloat16)                                      # (TK, D)
    xv = v_ref[0].astype(jnp.bfloat16)                                      # (TK, D)
    kh = (jnp.dot(xk, wk_ref[0], preferred_element_type=jnp.float32)
          + bk_ref[0]).astype(jnp.bfloat16)                                 # (TK, hd)
    vh = (jnp.dot(xv, wv_ref[0], preferred_element_type=jnp.float32)
          + bv_ref[0]).astype(jnp.bfloat16)                                 # (TK, hd)

    # Scores: contract the head dims directly (no explicit K transpose).
    s = jax.lax.dot_general(qh_ref[...], kh,
                            (((1,), (1,)), ((), ())),
                            preferred_element_type=jnp.float32)             # (S, TK) f32

    # Online softmax update (element-wise math stays f32).
    m_prev = m_ref[...]
    m_new = jnp.maximum(m_prev, jnp.max(s, axis=-1, keepdims=True))
    alpha = jnp.exp(m_prev - m_new)
    p = jnp.exp(s - m_new)
    l_ref[...] = alpha * l_ref[...] + jnp.sum(p, axis=-1, keepdims=True)
    acc_ref[...] = alpha * acc_ref[...] + jnp.dot(
        p.astype(jnp.bfloat16), vh, preferred_element_type=jnp.float32)
    m_ref[...] = m_new

    # Finish this head: normalize and fold its out-projection into the (S, D) accumulator.
    @pl.when(kv == n_kv - 1)
    def _():
        ctx = acc_ref[...] * pl.reciprocal(l_ref[...], approx=True)         # (S, hd) f32
        oacc_ref[...] += jnp.dot(ctx.astype(jnp.bfloat16), wo_ref[0],
                                 preferred_element_type=jnp.float32)

    # Last head of this batch element: add output bias and store.
    @pl.when(jnp.logical_and(h == nheads - 1, kv == n_kv - 1))
    def _():
        o_ref[0] = (oacc_ref[...] + bo_ref[...]).astype(o_ref.dtype)


def _pick_kv_tile(S):
    for t in (512, 256, 128):
        if S % t == 0:
            return t
    return S


def multihead_attention_block(query, key, value, params, *, nheads):
    """query/key/value: (B, S, D). Returns (B, S, D). Eval-mode dropout (identity)."""
    B, S, D = query.shape
    assert D % nheads == 0
    head_dim = D // nheads
    kv_tile = _pick_kv_tile(S)
    n_kv = S // kv_tile

    # Per-head weight slabs (layout plumbing done once, outside the kernel); bf16 weights
    # halve DMA bytes and feed the MXU at its bf16 peak.  Biases stay f32.
    # NOTE: q/k/v inputs may differ (cross-attention), so the QKV projections are not fused
    # into a single (D, 3D) matmul here.
    wq = params["wq"].reshape(D, nheads, head_dim).transpose(1, 0, 2).astype(jnp.bfloat16)
    wk = params["wk"].reshape(D, nheads, head_dim).transpose(1, 0, 2).astype(jnp.bfloat16)
    wv = params["wv"].reshape(D, nheads, head_dim).transpose(1, 0, 2).astype(jnp.bfloat16)
    bq = params["bq"].reshape(1, nheads, head_dim).transpose(1, 0, 2)   # (H, 1, hd) f32
    bk = params["bk"].reshape(1, nheads, head_dim).transpose(1, 0, 2)
    bv = params["bv"].reshape(1, nheads, head_dim).transpose(1, 0, 2)
    wo = params["wo"].reshape(nheads, head_dim, D).astype(jnp.bfloat16)  # (H, hd, D)
    bo = params["bo"]                                                    # (1, D) f32

    kernel = functools.partial(_mha_kernel, head_dim)

    q_spec = pl.BlockSpec((1, S, D), lambda b, h, kv: (b, 0, 0))
    kv_spec = pl.BlockSpec((1, kv_tile, D), lambda b, h, kv: (b, kv, 0))
    w_in_spec = pl.BlockSpec((1, D, head_dim), lambda b, h, kv: (h, 0, 0))
    b_in_spec = pl.BlockSpec((1, 1, head_dim), lambda b, h, kv: (h, 0, 0))
    wo_spec = pl.BlockSpec((1, head_dim, D), lambda b, h, kv: (h, 0, 0))
    bo_spec = pl.BlockSpec((1, D), lambda b, h, kv: (0, 0))
    out_spec = pl.BlockSpec((1, S, D), lambda b, h, kv: (b, 0, 0))

    return pl.pallas_call(
        kernel,
        out_shape=jax.ShapeDtypeStruct((B, S, D), query.dtype),
        grid_spec=pltpu.PrefetchScalarGridSpec(
            num_scalar_prefetch=0,
            grid=(B, nheads, n_kv),
            in_specs=[q_spec, kv_spec, kv_spec,
                      w_in_spec, w_in_spec, w_in_spec,
                      b_in_spec, b_in_spec, b_in_spec,
                      wo_spec, bo_spec],
            out_specs=out_spec,
            scratch_shapes=[
                pltpu.VMEM((S, head_dim), jnp.bfloat16),   # projected+scaled Q (per head)
                pltpu.VMEM((S, 1), jnp.float32),           # running row max
                pltpu.VMEM((S, 1), jnp.float32),           # running softmax denom
                pltpu.VMEM((S, head_dim), jnp.float32),    # per-head context accumulator
                pltpu.VMEM((S, D), jnp.float32),           # out-projection accumulator
            ],
        ),
        compiler_params=pltpu.CompilerParams(
            dimension_semantics=("parallel", "arbitrary", "arbitrary"),
            vmem_limit_bytes=48 * 1024 * 1024,
        ),
    )(query, key, value, wq, wk, wv, bq, bk, bv, wo, bo)


def _reference_mha(query, key, value, params, *, nheads):
    """Pure-JAX f32 reference for correctness checking."""
    B, S, D = query.shape
    hd = D // nheads
    scale = 1.0 / math.sqrt(hd)
    Q = query @ params["wq"] + params["bq"][0]
    K = key @ params["wk"] + params["bk"][0]
    V = value @ params["wv"] + params["bv"][0]
    Q = Q.reshape(B, S, nheads, hd).transpose(0, 2, 1, 3)
    K = K.reshape(B, S, nheads, hd).transpose(0, 2, 1, 3)
    V = V.reshape(B, S, nheads, hd).transpose(0, 2, 1, 3)
    s = jnp.einsum("bhqd,bhkd->bhqk", Q, K) * scale
    p = jax.nn.softmax(s, axis=-1)
    o = jnp.einsum("bhqk,bhkd->bhqd", p, V)
    o = o.transpose(0, 2, 1, 3).reshape(B, S, D)
    return o @ params["wo"] + params["bo"][0]


def init_params(key, d_model):
    ks = jax.random.split(key, 8)
    std = 1.0 / math.sqrt(d_model)
    return {
        "wq": jax.random.normal(ks[0], (d_model, d_model), jnp.float32) * std,
        "wk": jax.random.normal(ks[1], (d_model, d_model), jnp.float32) * std,
        "wv": jax.random.normal(ks[2], (d_model, d_model), jnp.float32) * std,
        "bq": jax.random.normal(ks[3], (1, d_model), jnp.float32) * 0.01,
        "bk": jax.random.normal(ks[4], (1, d_model), jnp.float32) * 0.01,
        "bv": jax.random.normal(ks[5], (1, d_model), jnp.float32) * 0.01,
        "wo": jax.random.normal(ks[6], (d_model, d_model), jnp.float32) * std,
        "bo": jax.random.normal(ks[7], (1, d_model), jnp.float32) * 0.01,
    }


if __name__ == "__main__":
    B, S, D, H = 2, 8, 32, 4

    root = jax.random.PRNGKey(0)
    k_param, k_q, k_k, k_v = jax.random.split(root, 4)
    params = init_params(k_param, D)

    query = jax.random.normal(k_q, (B, S, D), jnp.float32)
    key_ = jax.random.normal(k_k, (B, S, D), jnp.float32)
    value = jax.random.normal(k_v, (B, S, D), jnp.float32)

    out = multihead_attention_block(query, key_, value, params, nheads=H)
    out = jax.block_until_ready(out)

    ref = _reference_mha(query, key_, value, params, nheads=H)
    assert out.shape == (B, S, D)
    # bf16 MXU matmuls (f32 accumulate) + approx reciprocal vs an all-f32 reference.
    assert jnp.allclose(out, ref, atol=5e-2, rtol=5e-2), "mismatch vs reference"

    print("KERNEL_OK")
</pallas_src>

<mosaic_0001>
module attributes {stable_mosaic.version = 11 : i64} {
  func.func @_mha_kernel(%arg0: i32, %arg1: i32, %arg2: i32, %arg3: memref<1x8x32xf32, #tpu.memory_space<vmem>>, %arg4: memref<1x8x32xf32, #tpu.memory_space<vmem>>, %arg5: memref<1x8x32xf32, #tpu.memory_space<vmem>>, %arg6: memref<1x32x8xbf16, #tpu.memory_space<vmem>>, %arg7: memref<1x32x8xbf16, #tpu.memory_space<vmem>>, %arg8: memref<1x32x8xbf16, #tpu.memory_space<vmem>>, %arg9: memref<1x1x8xf32, #tpu.memory_space<vmem>>, %arg10: memref<1x1x8xf32, #tpu.memory_space<vmem>>, %arg11: memref<1x1x8xf32, #tpu.memory_space<vmem>>, %arg12: memref<1x8x32xbf16, #tpu.memory_space<vmem>>, %arg13: memref<1x32xf32, #tpu.memory_space<vmem>>, %arg14: memref<1x8x32xf32, #tpu.memory_space<vmem>>, %arg15: memref<8x8xbf16, #tpu.memory_space<vmem>>, %arg16: memref<8x1xf32, #tpu.memory_space<vmem>>, %arg17: memref<8x1xf32, #tpu.memory_space<vmem>>, %arg18: memref<8x8xf32, #tpu.memory_space<vmem>>, %arg19: memref<8x32xf32, #tpu.memory_space<vmem>>) attributes {dimension_semantics = [#tpu.dimension_semantics<parallel>, #tpu.dimension_semantics<arbitrary>, #tpu.dimension_semantics<arbitrary>], iteration_bounds = array<i64: 2, 4, 1>, scalar_prefetch = 0 : i64, scratch_operands = 5 : i64, tpu.core_type = #tpu.core_type<tc>, window_params = [{transform_indices = @transform_0, window_bounds = array<i64: 1, 8, 32>}, {transform_indices = @transform_1, window_bounds = array<i64: 1, 8, 32>}, {transform_indices = @transform_2, window_bounds = array<i64: 1, 8, 32>}, {transform_indices = @transform_3, window_bounds = array<i64: 1, 32, 8>}, {transform_indices = @transform_4, window_bounds = array<i64: 1, 32, 8>}, {transform_indices = @transform_5, window_bounds = array<i64: 1, 32, 8>}, {transform_indices = @transform_6, window_bounds = array<i64: 1, 1, 8>}, {transform_indices = @transform_7, window_bounds = array<i64: 1, 1, 8>}, {transform_indices = @transform_8, window_bounds = array<i64: 1, 1, 8>}, {transform_indices = @transform_9, window_bounds = array<i64: 1, 8, 32>}, {pipeline_mode = #tpu.pipeline_mode<synchronous>, transform_indices = @transform_10, window_bounds = array<i64: 1, 32>}, {transform_indices = @transform_11, window_bounds = array<i64: 1, 8, 32>}]} {
    %c0_i32 = arith.constant 0 : i32
    %0 = arith.cmpi eq, %arg1, %c0_i32 : i32
    %c0_i32_0 = arith.constant 0 : i32
    %1 = arith.cmpi eq, %arg2, %c0_i32_0 : i32
    %2 = arith.andi %0, %1 : i1
    %3 = arith.extui %2 : i1 to i32
    %c0_i32_1 = arith.constant 0 : i32
    %4 = arith.cmpi ne, %3, %c0_i32_1 : i32
    scf.if %4 {
      %cst_44 = arith.constant 0.000000e+00 : f32
      %63 = vector.broadcast %cst_44 : f32 to vector<8x32xf32>
      %c0_45 = arith.constant 0 : index
      %c0_46 = arith.constant 0 : index
      %64 = vector.load %arg19[%c0_45, %c0_46] : memref<8x32xf32, #tpu.memory_space<vmem>>, vector<8x32xf32>
      tpu.vector_store %arg19[%c0_45, %c0_46], %63 {strides = array<i32>} : memref<8x32xf32, #tpu.memory_space<vmem>>, vector<8x32xf32>,
    } else {
    }
    %c0_i32_2 = arith.constant 0 : i32
    %5 = arith.cmpi eq, %arg2, %c0_i32_2 : i32
    %6 = arith.extui %5 : i1 to i32
    %c0_i32_3 = arith.constant 0 : i32
    %7 = arith.cmpi ne, %6, %c0_i32_3 : i32
    scf.if %7 {
      %c0_44 = arith.constant 0 : index
      %c0_45 = arith.constant 0 : index
      %c0_46 = arith.constant 0 : index
      %63 = vector.load %arg3[%c0_44, %c0_45, %c0_46] : memref<1x8x32xf32, #tpu.memory_space<vmem>>, vector<1x8x32xf32>
      %64 = vector.shape_cast %63 : vector<1x8x32xf32> to vector<8x32xf32>
      %65 = arith.truncf %64 : vector<8x32xf32> to vector<8x32xbf16>
      %c0_47 = arith.constant 0 : index
      %c0_48 = arith.constant 0 : index
      %c0_49 = arith.constant 0 : index
      %66 = vector.load %arg6[%c0_47, %c0_48, %c0_49] : memref<1x32x8xbf16, #tpu.memory_space<vmem>>, vector<1x32x8xbf16>
      %67 = vector.shape_cast %66 : vector<1x32x8xbf16> to vector<32x8xbf16>
      %cst_50 = arith.constant dense<0.000000e+00> : vector<8x8xf32>
      %68 = tpu.matmul %65, %67, %cst_50 {dimension_numbers = #tpu.dot_dimension_numbers<[1], [0], [0], [1], [0, 0, 1, 1], [], []>} : vector<8x32xbf16>, vector<32x8xbf16>, vector<8x8xf32> -> vector<8x8xf32>
      %c0_51 = arith.constant 0 : index
      %c0_52 = arith.constant 0 : index
      %c0_53 = arith.constant 0 : index
      %69 = vector.load %arg9[%c0_51, %c0_52, %c0_53] : memref<1x1x8xf32, #tpu.memory_space<vmem>>, vector<1x1x8xf32>
      %70 = vector.shape_cast %69 : vector<1x1x8xf32> to vector<1x8xf32>
      %71 = vector.broadcast %70 : vector<1x8xf32> to vector<8x8xf32>
      %72 = arith.addf %68, %71 : vector<8x8xf32>
      %cst_54 = arith.constant 0.353553385 : f32
      %73 = vector.broadcast %cst_54 : f32 to vector<8x8xf32>
      %74 = arith.mulf %72, %73 : vector<8x8xf32>
      %75 = arith.truncf %74 : vector<8x8xf32> to vector<8x8xbf16>
      %c0_55 = arith.constant 0 : index
      %c0_56 = arith.constant 0 : index
      %76 = vector.load %arg15[%c0_55, %c0_56] : memref<8x8xbf16, #tpu.memory_space<vmem>>, vector<8x8xbf16>
      tpu.vector_store %arg15[%c0_55, %c0_56], %75 {strides = array<i32>} : memref<8x8xbf16, #tpu.memory_space<vmem>>, vector<8x8xbf16>,
      %cst_57 = arith.constant 0xFF800000 : f32
      %77 = vector.broadcast %cst_57 : f32 to vector<8x1xf32>
      %c0_58 = arith.constant 0 : index
      %c0_59 = arith.constant 0 : index
      %78 = vector.load %arg16[%c0_58, %c0_59] : memref<8x1xf32, #tpu.memory_space<vmem>>, vector<8x1xf32>
      tpu.vector_store %arg16[%c0_58, %c0_59], %77 {strides = array<i32>} : memref<8x1xf32, #tpu.memory_space<vmem>>, vector<8x1xf32>,
      %cst_60 = arith.constant 0.000000e+00 : f32
      %79 = vector.broadcast %cst_60 : f32 to vector<8x1xf32>
      %c0_61 = arith.constant 0 : index
      %c0_62 = arith.constant 0 : index
      %80 = vector.load %arg17[%c0_61, %c0_62] : memref<8x1xf32, #tpu.memory_space<vmem>>, vector<8x1xf32>
      tpu.vector_store %arg17[%c0_61, %c0_62], %79 {strides = array<i32>} : memref<8x1xf32, #tpu.memory_space<vmem>>, vector<8x1xf32>,
      %cst_63 = arith.constant 0.000000e+00 : f32
      %81 = vector.broadcast %cst_63 : f32 to vector<8x8xf32>
      %c0_64 = arith.constant 0 : index
      %c0_65 = arith.constant 0 : index
      %82 = vector.load %arg18[%c0_64, %c0_65] : memref<8x8xf32, #tpu.memory_space<vmem>>, vector<8x8xf32>
      tpu.vector_store %arg18[%c0_64, %c0_65], %81 {strides = array<i32>} : memref<8x8xf32, #tpu.memory_space<vmem>>, vector<8x8xf32>,
    } else {
    }
    %c0 = arith.constant 0 : index
    %c0_4 = arith.constant 0 : index
    %c0_5 = arith.constant 0 : index
    %8 = vector.load %arg4[%c0, %c0_4, %c0_5] : memref<1x8x32xf32, #tpu.memory_space<vmem>>, vector<1x8x32xf32>
    %9 = vector.shape_cast %8 : vector<1x8x32xf32> to vector<8x32xf32>
    %10 = arith.truncf %9 : vector<8x32xf32> to vector<8x32xbf16>
    %c0_6 = arith.constant 0 : index
    %c0_7 = arith.constant 0 : index
    %c0_8 = arith.constant 0 : index
    %11 = vector.load %arg5[%c0_6, %c0_7, %c0_8] : memref<1x8x32xf32, #tpu.memory_space<vmem>>, vector<1x8x32xf32>
    %12 = vector.shape_cast %11 : vector<1x8x32xf32> to vector<8x32xf32>
    %13 = arith.truncf %12 : vector<8x32xf32> to vector<8x32xbf16>
    %c0_9 = arith.constant 0 : index
    %c0_10 = arith.constant 0 : index
    %c0_11 = arith.constant 0 : index
    %14 = vector.load %arg7[%c0_9, %c0_10, %c0_11] : memref<1x32x8xbf16, #tpu.memory_space<vmem>>, vector<1x32x8xbf16>
    %15 = vector.shape_cast %14 : vector<1x32x8xbf16> to vector<32x8xbf16>
    %cst = arith.constant dense<0.000000e+00> : vector<8x8xf32>
    %16 = tpu.matmul %10, %15, %cst {dimension_numbers = #tpu.dot_dimension_numbers<[1], [0], [0], [1], [0, 0, 1, 1], [], []>} : vector<8x32xbf16>, vector<32x8xbf16>, vector<8x8xf32> -> vector<8x8xf32>
    %c0_12 = arith.constant 0 : index
    %c0_13 = arith.constant 0 : index
    %c0_14 = arith.constant 0 : index
    %17 = vector.load %arg10[%c0_12, %c0_13, %c0_14] : memref<1x1x8xf32, #tpu.memory_space<vmem>>, vector<1x1x8xf32>
    %18 = vector.shape_cast %17 : vector<1x1x8xf32> to vector<1x8xf32>
    %19 = vector.broadcast %18 : vector<1x8xf32> to vector<8x8xf32>
    %20 = arith.addf %16, %19 : vector<8x8xf32>
    %21 = arith.truncf %20 : vector<8x8xf32> to vector<8x8xbf16>
    %c0_15 = arith.constant 0 : index
    %c0_16 = arith.constant 0 : index
    %c0_17 = arith.constant 0 : index
    %22 = vector.load %arg8[%c0_15, %c0_16, %c0_17] : memref<1x32x8xbf16, #tpu.memory_space<vmem>>, vector<1x32x8xbf16>
    %23 = vector.shape_cast %22 : vector<1x32x8xbf16> to vector<32x8xbf16>
    %cst_18 = arith.constant dense<0.000000e+00> : vector<8x8xf32>
    %24 = tpu.matmul %13, %23, %cst_18 {dimension_numbers = #tpu.dot_dimension_numbers<[1], [0], [0], [1], [0, 0, 1, 1], [], []>} : vector<8x32xbf16>, vector<32x8xbf16>, vector<8x8xf32> -> vector<8x8xf32>
    %c0_19 = arith.constant 0 : index
    %c0_20 = arith.constant 0 : index
    %c0_21 = arith.constant 0 : index
    %25 = vector.load %arg11[%c0_19, %c0_20, %c0_21] : memref<1x1x8xf32, #tpu.memory_space<vmem>>, vector<1x1x8xf32>
    %26 = vector.shape_cast %25 : vector<1x1x8xf32> to vector<1x8xf32>
    %27 = vector.broadcast %26 : vector<1x8xf32> to vector<8x8xf32>
    %28 = arith.addf %24, %27 : vector<8x8xf32>
    %29 = arith.truncf %28 : vector<8x8xf32> to vector<8x8xbf16>
    %c0_22 = arith.constant 0 : index
    %c0_23 = arith.constant 0 : index
    %30 = vector.load %arg15[%c0_22, %c0_23] : memref<8x8xbf16, #tpu.memory_space<vmem>>, vector<8x8xbf16>
    %cst_24 = arith.constant dense<0.000000e+00> : vector<8x8xf32>
    %31 = tpu.matmul %30, %21, %cst_24 {dimension_numbers = #tpu.dot_dimension_numbers<[1], [1], [0], [0], [0, 0, 1, 0], [], []>} : vector<8x8xbf16>, vector<8x8xbf16>, vector<8x8xf32> -> vector<8x8xf32>
    %c0_25 = arith.constant 0 : index
    %c0_26 = arith.constant 0 : index
    %32 = vector.load %arg16[%c0_25, %c0_26] : memref<8x1xf32, #tpu.memory_space<vmem>>, vector<8x1xf32>
    %cst_27 = arith.constant dense<0xFF800000> : vector<8xf32>
    %33 = vector.multi_reduction <maximumf>, %31, %cst_27 [1] : vector<8x8xf32> to vector<8xf32>
    %34 = vector.shape_cast %33 : vector<8xf32> to vector<8x1xf32>
    %35 = arith.maximumf %32, %34 : vector<8x1xf32>
    %36 = arith.subf %32, %35 : vector<8x1xf32>
    %37 = math.exp %36 : vector<8x1xf32>
    %38 = vector.broadcast %35 : vector<8x1xf32> to vector<8x8xf32>
    %39 = arith.subf %31, %38 : vector<8x8xf32>
    %40 = math.exp %39 : vector<8x8xf32>
    %c0_28 = arith.constant 0 : index
    %c0_29 = arith.constant 0 : index
    %41 = vector.load %arg17[%c0_28, %c0_29] : memref<8x1xf32, #tpu.memory_space<vmem>>, vector<8x1xf32>
    %42 = arith.mulf %37, %41 : vector<8x1xf32>
    %cst_30 = arith.constant dense<0.000000e+00> : vector<8xf32>
    %43 = vector.multi_reduction <add>, %40, %cst_30 [1] : vector<8x8xf32> to vector<8xf32>
    %44 = vector.shape_cast %43 : vector<8xf32> to vector<8x1xf32>
    %45 = arith.addf %42, %44 : vector<8x1xf32>
    %c0_31 = arith.constant 0 : index
    %c0_32 = arith.constant 0 : index
    %46 = vector.load %arg17[%c0_31, %c0_32] : memref<8x1xf32, #tpu.memory_space<vmem>>, vector<8x1xf32>
    tpu.vector_store %arg17[%c0_31, %c0_32], %45 {strides = array<i32>} : memref<8x1xf32, #tpu.memory_space<vmem>>, vector<8x1xf32>,
    %c0_33 = arith.constant 0 : index
    %c0_34 = arith.constant 0 : index
    %47 = vector.load %arg18[%c0_33, %c0_34] : memref<8x8xf32, #tpu.memory_space<vmem>>, vector<8x8xf32>
    %48 = vector.broadcast %37 : vector<8x1xf32> to vector<8x8xf32>
    %49 = arith.mulf %48, %47 : vector<8x8xf32>
    %50 = arith.truncf %40 : vector<8x8xf32> to vector<8x8xbf16>
    %cst_35 = arith.constant dense<0.000000e+00> : vector<8x8xf32>
    %51 = tpu.matmul %50, %29, %cst_35 {dimension_numbers = #tpu.dot_dimension_numbers<[1], [0], [0], [1], [0, 0, 1, 1], [], []>} : vector<8x8xbf16>, vector<8x8xbf16>, vector<8x8xf32> -> vector<8x8xf32>
    %52 = arith.addf %49, %51 : vector<8x8xf32>
    %c0_36 = arith.constant 0 : index
    %c0_37 = arith.constant 0 : index
    %53 = vector.load %arg18[%c0_36, %c0_37] : memref<8x8xf32, #tpu.memory_space<vmem>>, vector<8x8xf32>
    tpu.vector_store %arg18[%c0_36, %c0_37], %52 {strides = array<i32>} : memref<8x8xf32, #tpu.memory_space<vmem>>, vector<8x8xf32>,
    %c0_38 = arith.constant 0 : index
    %c0_39 = arith.constant 0 : index
    %54 = vector.load %arg16[%c0_38, %c0_39] : memref<8x1xf32, #tpu.memory_space<vmem>>, vector<8x1xf32>
    tpu.vector_store %arg16[%c0_38, %c0_39], %35 {strides = array<i32>} : memref<8x1xf32, #tpu.memory_space<vmem>>, vector<8x1xf32>,
    %c0_i32_40 = arith.constant 0 : i32
    %55 = arith.cmpi eq, %arg2, %c0_i32_40 : i32
    %56 = arith.extui %55 : i1 to i32
    %c0_i32_41 = arith.constant 0 : i32
    %57 = arith.cmpi ne, %56, %c0_i32_41 : i32
    scf.if %57 {
      %c0_44 = arith.constant 0 : index
      %c0_45 = arith.constant 0 : index
      %63 = vector.load %arg18[%c0_44, %c0_45] : memref<8x8xf32, #tpu.memory_space<vmem>>, vector<8x8xf32>
      %c0_46 = arith.constant 0 : index
      %c0_47 = arith.constant 0 : index
      %64 = vector.load %arg17[%c0_46, %c0_47] : memref<8x1xf32, #tpu.memory_space<vmem>>, vector<8x1xf32>
      %65 = tpu.reciprocal %64 {approx = true} : vector<8x1xf32> -> vector<8x1xf32>
      %66 = vector.broadcast %65 : vector<8x1xf32> to vector<8x8xf32>
      %67 = arith.mulf %63, %66 : vector<8x8xf32>
      %c0_48 = arith.constant 0 : index
      %c0_49 = arith.constant 0 : index
      %68 = vector.load %arg19[%c0_48, %c0_49] : memref<8x32xf32, #tpu.memory_space<vmem>>, vector<8x32xf32>
      %69 = arith.truncf %67 : vector<8x8xf32> to vector<8x8xbf16>
      %c0_50 = arith.constant 0 : index
      %c0_51 = arith.constant 0 : index
      %c0_52 = arith.constant 0 : index
      %70 = vector.load %arg12[%c0_50, %c0_51, %c0_52] : memref<1x8x32xbf16, #tpu.memory_space<vmem>>, vector<1x8x32xbf16>
      %71 = vector.shape_cast %70 : vector<1x8x32xbf16> to vector<8x32xbf16>
      %cst_53 = arith.constant dense<0.000000e+00> : vector<8x32xf32>
      %72 = tpu.matmul %69, %71, %cst_53 {dimension_numbers = #tpu.dot_dimension_numbers<[1], [0], [0], [1], [0, 0, 1, 1], [], []>} : vector<8x8xbf16>, vector<8x32xbf16>, vector<8x32xf32> -> vector<8x32xf32>
      %73 = arith.addf %68, %72 : vector<8x32xf32>
      %c0_54 = arith.constant 0 : index
      %c0_55 = arith.constant 0 : index
      %74 = vector.load %arg19[%c0_54, %c0_55] : memref<8x32xf32, #tpu.memory_space<vmem>>, vector<8x32xf32>
      tpu.vector_store %arg19[%c0_54, %c0_55], %73 {strides = array<i32>} : memref<8x32xf32, #tpu.memory_space<vmem>>, vector<8x32xf32>,
    } else {
    }
    %c3_i32 = arith.constant 3 : i32
    %58 = arith.cmpi eq, %arg1, %c3_i32 : i32
    %c0_i32_42 = arith.constant 0 : i32
    %59 = arith.cmpi eq, %arg2, %c0_i32_42 : i32
    %60 = arith.andi %58, %59 : i1
    %61 = arith.extui %60 : i1 to i32
    %c0_i32_43 = arith.constant 0 : i32
    %62 = arith.cmpi ne, %61, %c0_i32_43 : i32
    scf.if %62 {
      %c0_44 = arith.constant 0 : index
      %c0_45 = arith.constant 0 : index
      %63 = vector.load %arg19[%c0_44, %c0_45] : memref<8x32xf32, #tpu.memory_space<vmem>>, vector<8x32xf32>
      %c0_46 = arith.constant 0 : index
      %c0_47 = arith.constant 0 : index
      %64 = vector.load %arg13[%c0_46, %c0_47] : memref<1x32xf32, #tpu.memory_space<vmem>>, vector<1x32xf32>
      %65 = vector.broadcast %64 : vector<1x32xf32> to vector<8x32xf32>
      %66 = arith.addf %63, %65 : vector<8x32xf32>
      %c0_48 = arith.constant 0 : index
      %c0_49 = arith.constant 0 : index
      %c0_50 = arith.constant 0 : index
      %67 = vector.load %arg14[%c0_48, %c0_49, %c0_50] : memref<1x8x32xf32, #tpu.memory_space<vmem>>, vector<1x8x32xf32>
      %68 = vector.shape_cast %67 : vector<1x8x32xf32> to vector<8x32xf32>
      %69 = vector.shape_cast %66 : vector<8x32xf32> to vector<1x8x32xf32>
      tpu.vector_store %arg14[%c0_48, %c0_49, %c0_50], %69 {strides = array<i32>} : memref<1x8x32xf32, #tpu.memory_space<vmem>>, vector<1x8x32xf32>,
    } else {
    }
    return
  }
  func.func @transform_0(%arg0: i32, %arg1: i32, %arg2: i32) -> (i32, i32, i32) {
    %c0_i32 = arith.constant 0 : i32
    %c0_i32_0 = arith.constant 0 : i32
    %c0_i32_1 = arith.constant 0 : i32
    return %arg0, %c0_i32, %c0_i32_0 : i32, i32, i32
  }
  func.func @transform_1(%arg0: i32, %arg1: i32, %arg2: i32) -> (i32, i32, i32) {
    %c0_i32 = arith.constant 0 : i32
    %c0_i32_0 = arith.constant 0 : i32
    return %arg0, %arg2, %c0_i32 : i32, i32, i32
  }
  func.func @transform_2(%arg0: i32, %arg1: i32, %arg2: i32) -> (i32, i32, i32) {
    %c0_i32 = arith.constant 0 : i32
    %c0_i32_0 = arith.constant 0 : i32
    return %arg0, %arg2, %c0_i32 : i32, i32, i32
  }
  func.func @transform_3(%arg0: i32, %arg1: i32, %arg2: i32) -> (i32, i32, i32) {
    %c0_i32 = arith.constant 0 : i32
    %c0_i32_0 = arith.constant 0 : i32
    %c0_i32_1 = arith.constant 0 : i32
    return %arg1, %c0_i32, %c0_i32_0 : i32, i32, i32
  }
  func.func @transform_4(%arg0: i32, %arg1: i32, %arg2: i32) -> (i32, i32, i32) {
    %c0_i32 = arith.constant 0 : i32
    %c0_i32_0 = arith.constant 0 : i32
    %c0_i32_1 = arith.constant 0 : i32
    return %arg1, %c0_i32, %c0_i32_0 : i32, i32, i32
  }
  func.func @transform_5(%arg0: i32, %arg1: i32, %arg2: i32) -> (i32, i32, i32) {
    %c0_i32 = arith.constant 0 : i32
    %c0_i32_0 = arith.constant 0 : i32
    %c0_i32_1 = arith.constant 0 : i32
    return %arg1, %c0_i32, %c0_i32_0 : i32, i32, i32
  }
  func.func @transform_6(%arg0: i32, %arg1: i32, %arg2: i32) -> (i32, i32, i32) {
    %c0_i32 = arith.constant 0 : i32
    %c0_i32_0 = arith.constant 0 : i32
    %c0_i32_1 = arith.constant 0 : i32
    return %arg1, %c0_i32, %c0_i32_0 : i32, i32, i32
  }
  func.func @transform_7(%arg0: i32, %arg1: i32, %arg2: i32) -> (i32, i32, i32) {
    %c0_i32 = arith.constant 0 : i32
    %c0_i32_0 = arith.constant 0 : i32
    %c0_i32_1 = arith.constant 0 : i32
    return %arg1, %c0_i32, %c0_i32_0 : i32, i32, i32
  }
  func.func @transform_8(%arg0: i32, %arg1: i32, %arg2: i32) -> (i32, i32, i32) {
    %c0_i32 = arith.constant 0 : i32
    %c0_i32_0 = arith.constant 0 : i32
    %c0_i32_1 = arith.constant 0 : i32
    return %arg1, %c0_i32, %c0_i32_0 : i32, i32, i32
  }
  func.func @transform_9(%arg0: i32, %arg1: i32, %arg2: i32) -> (i32, i32, i32) {
    %c0_i32 = arith.constant 0 : i32
    %c0_i32_0 = arith.constant 0 : i32
    %c0_i32_1 = arith.constant 0 : i32
    return %arg1, %c0_i32, %c0_i32_0 : i32, i32, i32
  }
  func.func @transform_10(%arg0: i32, %arg1: i32, %arg2: i32) -> (i32, i32) {
    %c0_i32 = arith.constant 0 : i32
    %c0_i32_0 = arith.constant 0 : i32
    %c0_i32_1 = arith.constant 0 : i32
    return %c0_i32, %c0_i32_0 : i32, i32
  }
  func.func @transform_11(%arg0: i32, %arg1: i32, %arg2: i32) -> (i32, i32, i32) {
    %c0_i32 = arith.constant 0 : i32
    %c0_i32_0 = arith.constant 0 : i32
    %c0_i32_1 = arith.constant 0 : i32
    return %arg0, %c0_i32, %c0_i32_0 : i32, i32, i32
  }
}

</mosaic_0001>

<llo_original>
// kernel: tpu_custom_call.1
$region0: #{tpu_custom_call.1}
  #allocation0 [shape = 'u32[]', space=smem, size = 0x4, offset = 0x4, fixed_abs, tag = 'smem constant byte address 0x4 - core index']
  #allocation1 [shape = 'u32[72,128]{1,0:T(1,128)}', space=vmem, size = 0x9000, scoped, tag = 'internal scratch']
  #allocation2 [shape = 'bf16[8,8]{1,0:T(8,128)(2,1)}', space=vmem, size = 0x800, scoped, tag = 'scratch operand']
  #allocation3 [shape = 'f32[8,1]{1,0:T(8,128)}', space=vmem, size = 0x1000, scoped, tag = 'scratch operand']
  #allocation4 [shape = 'f32[8,1]{1,0:T(8,128)}', space=vmem, size = 0x1000, scoped, tag = 'scratch operand']
  #allocation5 [shape = 'f32[8,8]{1,0:T(8,128)}', space=vmem, size = 0x1000, scoped, tag = 'scratch operand']
  #allocation6 [shape = 'f32[8,32]{1,0:T(8,128)}', space=vmem, size = 0x1000, scoped, tag = 'scratch operand']
  %s0 = inlined_call_operand.vmem [shape: f32[2,8,32], index: 0, kind: input, shape index: {}]
  %s1 = inlined_call_operand.vmem [shape: f32[2,8,32], index: 1, kind: input, shape index: {}]
  %s2 = inlined_call_operand.vmem [shape: f32[2,8,32], index: 2, kind: input, shape index: {}]
  %s3 = inlined_call_operand.vmem [shape: bf16[4,32,8], index: 3, kind: input, shape index: {}]
  %s4 = inlined_call_operand.vmem [shape: bf16[4,32,8], index: 4, kind: input, shape index: {}]
  %s5 = inlined_call_operand.vmem [shape: bf16[4,32,8], index: 5, kind: input, shape index: {}]
  %s6 = inlined_call_operand.vmem [shape: f32[4,1,8], index: 6, kind: input, shape index: {}]
  %s7 = inlined_call_operand.vmem [shape: f32[4,1,8], index: 7, kind: input, shape index: {}]
  %s8 = inlined_call_operand.vmem [shape: f32[4,1,8], index: 8, kind: input, shape index: {}]
  %s9 = inlined_call_operand.vmem [shape: bf16[4,8,32], index: 9, kind: input, shape index: {}]
  %s10 = inlined_call_operand.vmem [shape: f32[1,32], index: 10, kind: input, shape index: {}]
  %s11 = inlined_call_operand.hbm [shape: f32[2,8,32], index: 11, kind: output, shape index: {}]
  %s12 = sld [smem:[#allocation0]]
  $region93: #{tpu_custom_call.1} parent=0
    _
  %s14 = ssub.s32 1, %s12
  %s15 = scalar_select 0, %s14, %s12
  $region1: #{tpu_custom_call.1} parent=0
    #allocation7 [shape = 'u8[8192]{0}', space=vmem, size = 0x2000, scoped, tag = 'output window, operand 0']
    #allocation8 [shape = 's32[2]{0}', space=sflag, size = 0x8, scoped, tag = 'scoped memory for tpu_custom_call.1']
    %16 = vsyncpa [#allocation8], 0
    %s17 = scalar_lea.sflag [#allocation8], 1
    %18 = vsyncpa %s17, 0
    loop: start=0, step=1, limit=10
    $region2: #{tpu_custom_call.1} parent=1 // loop_pre_header
      _
    $region3: #{tpu_custom_call.1} parent=1 // loop_header
      %s20 = sphi 0, %s24
      %p21 = scmp.ge.s32.totalorder %s20, 10
      %s27 = sphi 0, %s46
      %s28 = sphi 0, %s42
      %s29 = sphi 0, %s38
      %s30 = sphi 0, %s27
      %s31 = sphi 0, %s28
      %s32 = sphi 0, %s29
      %s33 = sphi 0, %s30
      %s34 = sphi 0, %s31
      %s35 = sphi 0, %s32
      %s49 = sphi 0, %s51
      %s52 = sphi 0, %s49
      %s53 = sphi 0, %s52
      %s69 = sphi 0, %s53
      %s77 = sphi 0, %s79
      %s80 = sphi 0, %s77
      %s81 = sphi 0, %s80
      %s97 = sphi 0, %s81
      %s105 = sphi 0, %s107
      %s108 = sphi 0, %s105
      %s109 = sphi 0, %s108
      %s125 = sphi 0, %s109
      %s131 = sphi 0, %s133
      %s134 = sphi 0, %s131
      %s135 = sphi 0, %s134
      %s151 = sphi 0, %s135
      %s157 = sphi 0, %s159
      %s160 = sphi 0, %s157
      %s161 = sphi 0, %s160
      %s177 = sphi 0, %s161
      %s183 = sphi 0, %s185
      %s186 = sphi 0, %s183
      %s187 = sphi 0, %s186
      %s203 = sphi 0, %s187
      %s209 = sphi 0, %s211
      %s212 = sphi 0, %s209
      %s213 = sphi 0, %s212
      %s229 = sphi 0, %s213
      %s235 = sphi 0, %s237
      %s238 = sphi 0, %s235
      %s239 = sphi 0, %s238
      %s255 = sphi 0, %s239
      %s261 = sphi 0, %s263
      %s264 = sphi 0, %s261
      %s265 = sphi 0, %s264
      %s281 = sphi 0, %s265
      %s287 = sphi 0, %s289
      %s290 = sphi 0, %s287
      %s291 = sphi 0, %s290
      %s307 = sphi 0, %s291
      %s311 = sphi 0, %s311
      %s313 = sphi 0, %s311
      %s314 = sphi 0, %s313
      %s328 = sphi 0, %s314
      %s334 = sphi 0, %s336
      %s337 = sphi 0, %s334
      %s338 = sphi 0, %s337
      %s354 = sphi 0, %s338
    $region4: #{tpu_custom_call.1} parent=1 // loop_header_branch
      %23 = sbr.rel (%p21) target = $region8
    $region5: #{tpu_custom_call.1} parent=1 // loop_body
      %s25 = ssub.s32 %s20, 1
      %s26 = ssub.s32 %s20, 2
      %s36 = sadd.s32 1, %s29
      %p37 = scmp.ge.s32.totalorder %s36, 1
      %s38 = scalar_select %p37, 0, %s36
      %s39 = sadd.s32 1, %s28
      %s40 = scalar_select %p37, %s39, %s28
      %p41 = scmp.ge.s32.totalorder %s40, 4
      %s42 = scalar_select %p41, 0, %s40
      %s43 = sadd.s32 1, %s27
      %s44 = scalar_select %p41, %s43, %s27
      %p45 = scmp.ge.s32.totalorder %s44, 2
      %s46 = scalar_select %p45, 0, %s44
      %s47 = ssub.s32 %s27, %s46
      %p48 = scmp.eq.s32.totalorder %s47, 0
      %s50 = sadd.s32 %s49, 1
      %s51 = scalar_select %p48, %s49, %s50
      %p54 = pneg %p48
      %p55 = scmp.eq.s32.totalorder %s20, 7
      %p56 = por %p54, %p55
      %p57 = scmp.ne.s32.totalorder %s49, %s52
      %p58 = scmp.eq.s32.totalorder %s20, 0
      %p59 = por %p57, %p58
      %p60 = scmp.ne.s32.totalorder %s49, %s52
      %p61 = scmp.eq.s32.totalorder %s25, 7
      %p62 = por %p60, %p61
      %p63 = scmp.ne.s32.totalorder %s52, %s53
      %p64 = scmp.eq.s32.totalorder %s25, 0
      %p65 = por %p63, %p64
      %p66 = scmp.ne.s32.totalorder %s52, %s53
      %p67 = scmp.eq.s32.totalorder %s26, 7
      %p68 = por %p66, %p67
      %p70 = scmp.ne.s32.totalorder %s53, %s69
      %p71 = scmp.eq.s32.totalorder %s26, 0
      %p72 = por %p70, %p71
      %s73 = ssub.s32 %s27, %s46
      %s74 = ssub.s32 %s29, %s38
      %s75 = sor.u32 %s73, %s74
      %p76 = scmp.eq.s32.totalorder %s75, 0
      %s78 = sadd.s32 %s77, 1
      %s79 = scalar_select %p76, %s77, %s78
      %p82 = pneg %p76
      %p83 = scmp.eq.s32.totalorder %s20, 7
      %p84 = por %p82, %p83
      %p85 = scmp.ne.s32.totalorder %s77, %s80
      %p86 = scmp.eq.s32.totalorder %s20, 0
      %p87 = por %p85, %p86
      %p88 = scmp.ne.s32.totalorder %s77, %s80
      %p89 = scmp.eq.s32.totalorder %s25, 7
      %p90 = por %p88, %p89
      %p91 = scmp.ne.s32.totalorder %s80, %s81
      %p92 = scmp.eq.s32.totalorder %s25, 0
      %p93 = por %p91, %p92
      %p94 = scmp.ne.s32.totalorder %s80, %s81
      %p95 = scmp.eq.s32.totalorder %s26, 7
      %p96 = por %p94, %p95
      %p98 = scmp.ne.s32.totalorder %s81, %s97
      %p99 = scmp.eq.s32.totalorder %s26, 0
      %p100 = por %p98, %p99
      %s101 = ssub.s32 %s27, %s46
      %s102 = ssub.s32 %s29, %s38
      %s103 = sor.u32 %s101, %s102
      %p104 = scmp.eq.s32.totalorder %s103, 0
      %s106 = sadd.s32 %s105, 1
      %s107 = scalar_select %p104, %s105, %s106
      %p110 = pneg %p104
      %p111 = scmp.eq.s32.totalorder %s20, 7
      %p112 = por %p110, %p111
      %p113 = scmp.ne.s32.totalorder %s105, %s108
      %p114 = scmp.eq.s32.totalorder %s20, 0
      %p115 = por %p113, %p114
      %p116 = scmp.ne.s32.totalorder %s105, %s108
      %p117 = scmp.eq.s32.totalorder %s25, 7
      %p118 = por %p116, %p117
      %p119 = scmp.ne.s32.totalorder %s108, %s109
      %p120 = scmp.eq.s32.totalorder %s25, 0
      %p121 = por %p119, %p120
      %p122 = scmp.ne.s32.totalorder %s108, %s109
      %p123 = scmp.eq.s32.totalorder %s26, 7
      %p124 = por %p122, %p123
      %p126 = scmp.ne.s32.totalorder %s109, %s125
      %p127 = scmp.eq.s32.totalorder %s26, 0
      %p128 = por %p126, %p127
      %s129 = ssub.s32 %s28, %s42
      %p130 = scmp.eq.s32.totalorder %s129, 0
      %s132 = sadd.s32 %s131, 1
      %s133 = scalar_select %p130, %s131, %s132
      %p136 = pneg %p130
      %p137 = scmp.eq.s32.totalorder %s20, 7
      %p138 = por %p136, %p137
      %p139 = scmp.ne.s32.totalorder %s131, %s134
      %p140 = scmp.eq.s32.totalorder %s20, 0
      %p141 = por %p139, %p140
      %p142 = scmp.ne.s32.totalorder %s131, %s134
      %p143 = scmp.eq.s32.totalorder %s25, 7
      %p144 = por %p142, %p143
      %p145 = scmp.ne.s32.totalorder %s134, %s135
      %p146 = scmp.eq.s32.totalorder %s25, 0
      %p147 = por %p145, %p146
      %p148 = scmp.ne.s32.totalorder %s134, %s135
      %p149 = scmp.eq.s32.totalorder %s26, 7
      %p150 = por %p148, %p149
      %p152 = scmp.ne.s32.totalorder %s135, %s151
      %p153 = scmp.eq.s32.totalorder %s26, 0
      %p154 = por %p152, %p153
      %s155 = ssub.s32 %s28, %s42
      %p156 = scmp.eq.s32.totalorder %s155, 0
      %s158 = sadd.s32 %s157, 1
      %s159 = scalar_select %p156, %s157, %s158
      %p162 = pneg %p156
      %p163 = scmp.eq.s32.totalorder %s20, 7
      %p164 = por %p162, %p163
      %p165 = scmp.ne.s32.totalorder %s157, %s160
      %p166 = scmp.eq.s32.totalorder %s20, 0
      %p167 = por %p165, %p166
      %p168 = scmp.ne.s32.totalorder %s157, %s160
      %p169 = scmp.eq.s32.totalorder %s25, 7
      %p170 = por %p168, %p169
      %p171 = scmp.ne.s32.totalorder %s160, %s161
      %p172 = scmp.eq.s32.totalorder %s25, 0
      %p173 = por %p171, %p172
      %p174 = scmp.ne.s32.totalorder %s160, %s161
      %p175 = scmp.eq.s32.totalorder %s26, 7
      %p176 = por %p174, %p175
      %p178 = scmp.ne.s32.totalorder %s161, %s177
      %p179 = scmp.eq.s32.totalorder %s26, 0
      %p180 = por %p178, %p179
      %s181 = ssub.s32 %s28, %s42
      %p182 = scmp.eq.s32.totalorder %s181, 0
      %s184 = sadd.s32 %s183, 1
      %s185 = scalar_select %p182, %s183, %s184
      %p188 = pneg %p182
      %p189 = scmp.eq.s32.totalorder %s20, 7
      %p190 = por %p188, %p189
      %p191 = scmp.ne.s32.totalorder %s183, %s186
      %p192 = scmp.eq.s32.totalorder %s20, 0
      %p193 = por %p191, %p192
      %p194 = scmp.ne.s32.totalorder %s183, %s186
      %p195 = scmp.eq.s32.totalorder %s25, 7
      %p196 = por %p194, %p195
      %p197 = scmp.ne.s32.totalorder %s186, %s187
      %p198 = scmp.eq.s32.totalorder %s25, 0
      %p199 = por %p197, %p198
      %p200 = scmp.ne.s32.totalorder %s186, %s187
      %p201 = scmp.eq.s32.totalorder %s26, 7
      %p202 = por %p200, %p201
      %p204 = scmp.ne.s32.totalorder %s187, %s203
      %p205 = scmp.eq.s32.totalorder %s26, 0
      %p206 = por %p204, %p205
      %s207 = ssub.s32 %s28, %s42
      %p208 = scmp.eq.s32.totalorder %s207, 0
      %s210 = sadd.s32 %s209, 1
      %s211 = scalar_select %p208, %s209, %s210
      %p214 = pneg %p208
      %p215 = scmp.eq.s32.totalorder %s20, 7
      %p216 = por %p214, %p215
      %p217 = scmp.ne.s32.totalorder %s209, %s212
      %p218 = scmp.eq.s32.totalorder %s20, 0
      %p219 = por %p217, %p218
      %p220 = scmp.ne.s32.totalorder %s209, %s212
      %p221 = scmp.eq.s32.totalorder %s25, 7
      %p222 = por %p220, %p221
      %p223 = scmp.ne.s32.totalorder %s212, %s213
      %p224 = scmp.eq.s32.totalorder %s25, 0
      %p225 = por %p223, %p224
      %p226 = scmp.ne.s32.totalorder %s212, %s213
      %p227 = scmp.eq.s32.totalorder %s26, 7
      %p228 = por %p226, %p227
      %p230 = scmp.ne.s32.totalorder %s213, %s229
      %p231 = scmp.eq.s32.totalorder %s26, 0
      %p232 = por %p230, %p231
      %s233 = ssub.s32 %s28, %s42
      %p234 = scmp.eq.s32.totalorder %s233, 0
      %s236 = sadd.s32 %s235, 1
      %s237 = scalar_select %p234, %s235, %s236
      %p240 = pneg %p234
      %p241 = scmp.eq.s32.totalorder %s20, 7
      %p242 = por %p240, %p241
      %p243 = scmp.ne.s32.totalorder %s235, %s238
      %p244 = scmp.eq.s32.totalorder %s20, 0
      %p245 = por %p243, %p244
      %p246 = scmp.ne.s32.totalorder %s235, %s238
      %p247 = scmp.eq.s32.totalorder %s25, 7
      %p248 = por %p246, %p247
      %p249 = scmp.ne.s32.totalorder %s238, %s239
      %p250 = scmp.eq.s32.totalorder %s25, 0
      %p251 = por %p249, %p250
      %p252 = scmp.ne.s32.totalorder %s238, %s239
      %p253 = scmp.eq.s32.totalorder %s26, 7
      %p254 = por %p252, %p253
      %p256 = scmp.ne.s32.totalorder %s239, %s255
      %p257 = scmp.eq.s32.totalorder %s26, 0
      %p258 = por %p256, %p257
      %s259 = ssub.s32 %s28, %s42
      %p260 = scmp.eq.s32.totalorder %s259, 0
      %s262 = sadd.s32 %s261, 1
      %s263 = scalar_select %p260, %s261, %s262
      %p266 = pneg %p260
      %p267 = scmp.eq.s32.totalorder %s20, 7
      %p268 = por %p266, %p267
      %p269 = scmp.ne.s32.totalorder %s261, %s264
      %p270 = scmp.eq.s32.totalorder %s20, 0
      %p271 = por %p269, %p270
      %p272 = scmp.ne.s32.totalorder %s261, %s264
      %p273 = scmp.eq.s32.totalorder %s25, 7
      %p274 = por %p272, %p273
      %p275 = scmp.ne.s32.totalorder %s264, %s265
      %p276 = scmp.eq.s32.totalorder %s25, 0
      %p277 = por %p275, %p276
      %p278 = scmp.ne.s32.totalorder %s264, %s265
      %p279 = scmp.eq.s32.totalorder %s26, 7
      %p280 = por %p278, %p279
      %p282 = scmp.ne.s32.totalorder %s265, %s281
      %p283 = scmp.eq.s32.totalorder %s26, 0
      %p284 = por %p282, %p283
      %s285 = ssub.s32 %s28, %s42
      %p286 = scmp.eq.s32.totalorder %s285, 0
      %s288 = sadd.s32 %s287, 1
      %s289 = scalar_select %p286, %s287, %s288
      %p292 = pneg %p286
      %p293 = scmp.eq.s32.totalorder %s20, 7
      %p294 = por %p292, %p293
      %p295 = scmp.ne.s32.totalorder %s287, %s290
      %p296 = scmp.eq.s32.totalorder %s20, 0
      %p297 = por %p295, %p296
      %p298 = scmp.ne.s32.totalorder %s287, %s290
      %p299 = scmp.eq.s32.totalorder %s25, 7
      %p300 = por %p298, %p299
      %p301 = scmp.ne.s32.totalorder %s290, %s291
      %p302 = scmp.eq.s32.totalorder %s25, 0
      %p303 = por %p301, %p302
      %p304 = scmp.ne.s32.totalorder %s290, %s291
      %p305 = scmp.eq.s32.totalorder %s26, 7
      %p306 = por %p304, %p305
      %p308 = scmp.ne.s32.totalorder %s291, %s307
      %p309 = scmp.eq.s32.totalorder %s26, 0
      %p310 = por %p308, %p309
      %s312 = sadd.s32 %s311, 1
      %p315 = scmp.eq.s32.totalorder %s20, 7
      %p316 = scmp.ne.s32.totalorder %s311, %s313
      %p317 = scmp.eq.s32.totalorder %s20, 0
      %p318 = por %p316, %p317
      %p319 = scmp.ne.s32.totalorder %s311, %s313
      %p320 = scmp.eq.s32.totalorder %s25, 7
      %p321 = por %p319, %p320
      %p322 = scmp.ne.s32.totalorder %s313, %s314
      %p323 = scmp.eq.s32.totalorder %s25, 0
      %p324 = por %p322, %p323
      %p325 = scmp.ne.s32.totalorder %s313, %s314
      %p326 = scmp.eq.s32.totalorder %s26, 7
      %p327 = por %p325, %p326
      %p329 = scmp.ne.s32.totalorder %s314, %s328
      %p330 = scmp.eq.s32.totalorder %s26, 0
      %p331 = por %p329, %p330
      %s332 = ssub.s32 %s27, %s46
      %p333 = scmp.eq.s32.totalorder %s332, 0
      %s335 = sadd.s32 %s334, 1
      %s336 = scalar_select %p333, %s334, %s335
      %p339 = pneg %p333
      %p340 = scmp.eq.s32.totalorder %s20, 7
      %p341 = por %p339, %p340
      %p342 = scmp.ne.s32.totalorder %s334, %s337
      %p343 = scmp.eq.s32.totalorder %s20, 0
      %p344 = por %p342, %p343
      %p345 = scmp.ne.s32.totalorder %s334, %s337
      %p346 = scmp.eq.s32.totalorder %s25, 7
      %p347 = por %p345, %p346
      %p348 = scmp.ne.s32.totalorder %s337, %s338
      %p349 = scmp.eq.s32.totalorder %s25, 0
      %p350 = por %p348, %p349
      %p351 = scmp.ne.s32.totalorder %s337, %s338
      %p352 = scmp.eq.s32.totalorder %s26, 7
      %p353 = por %p351, %p352
      %p355 = scmp.ne.s32.totalorder %s338, %s354
      %p356 = scmp.eq.s32.totalorder %s26, 0
      %p357 = por %p355, %p356
      %p358 = scmp.le.s32.totalorder 1, %s20
      %p359 = scmp.lt.s32.totalorder %s20, 9
      %p360 = pnand %p358, %p359
      %p361 = pneg %p360
      // Predicated region
      $region9: #{tpu_custom_call.1} parent=5 // pred_check
        _
      $region10: #{tpu_custom_call.1} parent=5 // pred_check_branch
        %363 = sbr.rel (%p360) target = $region12
      $region11: #{tpu_custom_call.1} parent=5 // pred_region
        %s364 = ssub.s32 %s20, 1
        // Predicated region
        $region13: #{tpu_custom_call.1} parent=11 // pred_check
          %p365 = pneg %p324
        $region14: #{tpu_custom_call.1} parent=11 // pred_check_branch
          %367 = sbr.rel (%p365) target = $region16
        $region15: #{tpu_custom_call.1} parent=11 // pred_region
          _
        $region16: #{tpu_custom_call.1} parent=11 // pred_fallthru
          _
      $region12: #{tpu_custom_call.1} parent=5 // pred_fallthru
        _
      %p368 = scmp.lt.s32.totalorder %s20, 8
      // Predicated region
      $region17: #{tpu_custom_call.1} parent=5 // pred_check
        %p369 = pneg %p368
      $region18: #{tpu_custom_call.1} parent=5 // pred_check_branch
        %371 = sbr.rel (%p369) target = $region20
      $region19: #{tpu_custom_call.1} parent=5 // pred_region
        // Predicated region
        $region21: #{tpu_custom_call.1} parent=19 // pred_check
          %p372 = pneg %p59
        $region22: #{tpu_custom_call.1} parent=19 // pred_check_branch
          %374 = sbr.rel (%p372) target = $region24
        $region23: #{tpu_custom_call.1} parent=19 // pred_region
          %p375 = scmp.lt.s32.totalorder %s27, 1
          %s376 = scalar_select %p375, %s27, 1
          %s377 = smul.addr %s376, 8
          %s378 = scalar_lea.vmem %s0, %s377
        $region24: #{tpu_custom_call.1} parent=19 // pred_fallthru
          _
        // Predicated region
        $region25: #{tpu_custom_call.1} parent=19 // pred_check
          %p379 = pneg %p87
        $region26: #{tpu_custom_call.1} parent=19 // pred_check_branch
          %381 = sbr.rel (%p379) target = $region28
        $region27: #{tpu_custom_call.1} parent=19 // pred_region
          %p382 = scmp.lt.s32.totalorder %s27, 1
          %s383 = scalar_select %p382, %s27, 1
          %p384 = scmp.lt.s32.totalorder %s29, 0
          %s385 = scalar_select %p384, %s29, 0
          %s386 = sadd.s32 %s385, %s383
          %s387 = smul.addr %s386, 8
          %s388 = scalar_lea.vmem %s1, %s387
        $region28: #{tpu_custom_call.1} parent=19 // pred_fallthru
          _
        // Predicated region
        $region29: #{tpu_custom_call.1} parent=19 // pred_check
          %p389 = pneg %p115
        $region30: #{tpu_custom_call.1} parent=19 // pred_check_branch
          %391 = sbr.rel (%p389) target = $region32
        $region31: #{tpu_custom_call.1} parent=19 // pred_region
          %p392 = scmp.lt.s32.totalorder %s27, 1
          %s393 = scalar_select %p392, %s27, 1
          %p394 = scmp.lt.s32.totalorder %s29, 0
          %s395 = scalar_select %p394, %s29, 0
          %s396 = sadd.s32 %s395, %s393
          %s397 = smul.addr %s396, 8
          %s398 = scalar_lea.vmem %s2, %s397
        $region32: #{tpu_custom_call.1} parent=19 // pred_fallthru
          _
        // Predicated region
        $region33: #{tpu_custom_call.1} parent=19 // pred_check
          %p399 = pneg %p141
        $region34: #{tpu_custom_call.1} parent=19 // pred_check_branch
          %401 = sbr.rel (%p399) target = $region36
        $region35: #{tpu_custom_call.1} parent=19 // pred_region
          %p402 = scmp.lt.s32.totalorder %s28, 3
          %s403 = scalar_select %p402, %s28, 3
          %s404 = smul.addr %s403, 4
          %s405 = smul.addr %s404, 4
          %s406 = scalar_lea.vmem %s3, %s405
        $region36: #{tpu_custom_call.1} parent=19 // pred_fallthru
          _
        // Predicated region
        $region37: #{tpu_custom_call.1} parent=19 // pred_check
          %p407 = pneg %p167
        $region38: #{tpu_custom_call.1} parent=19 // pred_check_branch
          %409 = sbr.rel (%p407) target = $region40
        $region39: #{tpu_custom_call.1} parent=19 // pred_region
          %p410 = scmp.lt.s32.totalorder %s28, 3
          %s411 = scalar_select %p410, %s28, 3
          %s412 = smul.addr %s411, 4
          %s413 = smul.addr %s412, 4
          %s414 = scalar_lea.vmem %s4, %s413
        $region40: #{tpu_custom_call.1} parent=19 // pred_fallthru
          _
        // Predicated region
        $region41: #{tpu_custom_call.1} parent=19 // pred_check
          %p415 = pneg %p193
        $region42: #{tpu_custom_call.1} parent=19 // pred_check_branch
          %417 = sbr.rel (%p415) target = $region44
        $region43: #{tpu_custom_call.1} parent=19 // pred_region
          %p418 = scmp.lt.s32.totalorder %s28, 3
          %s419 = scalar_select %p418, %s28, 3
          %s420 = smul.addr %s419, 4
          %s421 = smul.addr %s420, 4
          %s422 = scalar_lea.vmem %s5, %s421
        $region44: #{tpu_custom_call.1} parent=19 // pred_fallthru
          _
        // Predicated region
        $region45: #{tpu_custom_call.1} parent=19 // pred_check
          %p423 = pneg %p219
        $region46: #{tpu_custom_call.1} parent=19 // pred_check_branch
          %425 = sbr.rel (%p423) target = $region48
        $region47: #{tpu_custom_call.1} parent=19 // pred_region
          %p426 = scmp.lt.s32.totalorder %s28, 3
          %s427 = scalar_select %p426, %s28, 3
          %s428 = scalar_lea.vmem %s6, %s427
        $region48: #{tpu_custom_call.1} parent=19 // pred_fallthru
          _
        // Predicated region
        $region49: #{tpu_custom_call.1} parent=19 // pred_check
          %p429 = pneg %p245
        $region50: #{tpu_custom_call.1} parent=19 // pred_check_branch
          %431 = sbr.rel (%p429) target = $region52
        $region51: #{tpu_custom_call.1} parent=19 // pred_region
          %p432 = scmp.lt.s32.totalorder %s28, 3
          %s433 = scalar_select %p432, %s28, 3
          %s434 = scalar_lea.vmem %s7, %s433
        $region52: #{tpu_custom_call.1} parent=19 // pred_fallthru
          _
        // Predicated region
        $region53: #{tpu_custom_call.1} parent=19 // pred_check
          %p435 = pneg %p271
        $region54: #{tpu_custom_call.1} parent=19 // pred_check_branch
          %437 = sbr.rel (%p435) target = $region56
        $region55: #{tpu_custom_call.1} parent=19 // pred_region
          %p438 = scmp.lt.s32.totalorder %s28, 3
          %s439 = scalar_select %p438, %s28, 3
          %s440 = scalar_lea.vmem %s8, %s439
        $region56: #{tpu_custom_call.1} parent=19 // pred_fallthru
          _
        // Predicated region
        $region57: #{tpu_custom_call.1} parent=19 // pred_check
          %p441 = pneg %p297
        $region58: #{tpu_custom_call.1} parent=19 // pred_check_branch
          %443 = sbr.rel (%p441) target = $region60
        $region59: #{tpu_custom_call.1} parent=19 // pred_region
          %p444 = scmp.lt.s32.totalorder %s28, 3
          %s445 = scalar_select %p444, %s28, 3
          %s446 = smul.addr %s445, 4
          %s447 = scalar_lea.vmem %s9, %s446
        $region60: #{tpu_custom_call.1} parent=19 // pred_fallthru
          _
      $region20: #{tpu_custom_call.1} parent=5 // pred_fallthru
        _
      %p448 = scmp.le.s32.totalorder 1, %s20
      %p449 = scmp.lt.s32.totalorder %s20, 9
      %p450 = pnand %p448, %p449
      %p451 = pneg %p450
      // Predicated region
      $region61: #{tpu_custom_call.1} parent=5 // pred_check
        _
      $region62: #{tpu_custom_call.1} parent=5 // pred_check_branch
        %453 = sbr.rel (%p450) target = $region64
      $region63: #{tpu_custom_call.1} parent=5 // pred_region
        %s454 = ssub.s32 %s20, 1
        %p455 = scmp.lt.s32.totalorder %s30, 1
        %s456 = scalar_select %p455, %s30, 1
        %s457 = smul.addr %s456, 8
        %s458 = scalar_lea.vmem %s0, %s457
        %p459 = pneg %p65
        %p460 = pneg %p62
        %p461 = scmp.lt.s32.totalorder %s30, 1
        %s462 = scalar_select %p461, %s30, 1
        %p463 = scmp.lt.s32.totalorder %s32, 0
        %s464 = scalar_select %p463, %s32, 0
        %s465 = sadd.s32 %s464, %s462
        %s466 = smul.addr %s465, 8
        %s467 = scalar_lea.vmem %s1, %s466
        %p468 = pneg %p93
        %p469 = pneg %p90
        %p470 = scmp.lt.s32.totalorder %s30, 1
        %s471 = scalar_select %p470, %s30, 1
        %p472 = scmp.lt.s32.totalorder %s32, 0
        %s473 = scalar_select %p472, %s32, 0
        %s474 = sadd.s32 %s473, %s471
        %s475 = smul.addr %s474, 8
        %s476 = scalar_lea.vmem %s2, %s475
        %p477 = pneg %p121
        %p478 = pneg %p118
        %p479 = scmp.lt.s32.totalorder %s31, 3
        %s480 = scalar_select %p479, %s31, 3
        %s481 = smul.addr %s480, 4
        %s482 = smul.addr %s481, 4
        %s483 = scalar_lea.vmem %s3, %s482
        %p484 = pneg %p147
        %p485 = pneg %p144
        %p486 = scmp.lt.s32.totalorder %s31, 3
        %s487 = scalar_select %p486, %s31, 3
        %s488 = smul.addr %s487, 4
        %s489 = smul.addr %s488, 4
        %s490 = scalar_lea.vmem %s4, %s489
        %p491 = pneg %p173
        %p492 = pneg %p170
        %p493 = scmp.lt.s32.totalorder %s31, 3
        %s494 = scalar_select %p493, %s31, 3
        %s495 = smul.addr %s494, 4
        %s496 = smul.addr %s495, 4
        %s497 = scalar_lea.vmem %s5, %s496
        %p498 = pneg %p199
        %p499 = pneg %p196
        %p500 = scmp.lt.s32.totalorder %s31, 3
        %s501 = scalar_select %p500, %s31, 3
        %s502 = scalar_lea.vmem %s6, %s501
        %p503 = pneg %p225
        %p504 = pneg %p222
        %p505 = scmp.lt.s32.totalorder %s31, 3
        %s506 = scalar_select %p505, %s31, 3
        %s507 = scalar_lea.vmem %s7, %s506
        %p508 = pneg %p251
        %p509 = pneg %p248
        %p510 = scmp.lt.s32.totalorder %s31, 3
        %s511 = scalar_select %p510, %s31, 3
        %s512 = scalar_lea.vmem %s8, %s511
        %p513 = pneg %p277
        %p514 = pneg %p274
        %p515 = scmp.lt.s32.totalorder %s31, 3
        %s516 = scalar_select %p515, %s31, 3
        %s517 = smul.addr %s516, 4
        %s518 = scalar_lea.vmem %s9, %s517
        %p519 = pneg %p303
        %p520 = pneg %p300
        %p521 = pneg %p324
        %p522 = pneg %p321
        %p523 = pneg %p350
        %p524 = pneg %p347
        %s525 = sand.u32 %s337, 1
        %s526 = scalar_lea.sflag [#allocation8], %s525
        %s527 = sand.u32 %s337, 1
        %s528 = smul.addr %s527, 8
        %s529 = scalar_lea.vmem [#allocation7], %s528
        %p530 = scmp.lt.s32.totalorder %s30, 1
        %s531 = scalar_select %p530, %s30, 1
        %s532 = smul.addr %s531, 8
        %s533 = scalar_lea.vmem %s0, %s532
        %p534 = scmp.lt.s32.totalorder %s30, 1
        %s535 = scalar_select %p534, %s30, 1
        %p536 = scmp.lt.s32.totalorder %s32, 0
        %s537 = scalar_select %p536, %s32, 0
        %s538 = sadd.s32 %s537, %s535
        %s539 = smul.addr %s538, 8
        %s540 = scalar_lea.vmem %s1, %s539
        %p541 = scmp.lt.s32.totalorder %s30, 1
        %s542 = scalar_select %p541, %s30, 1
        %p543 = scmp.lt.s32.totalorder %s32, 0
        %s544 = scalar_select %p543, %s32, 0
        %s545 = sadd.s32 %s544, %s542
        %s546 = smul.addr %s545, 8
        %s547 = scalar_lea.vmem %s2, %s546
        %p548 = scmp.lt.s32.totalorder %s31, 3
        %s549 = scalar_select %p548, %s31, 3
        %s550 = smul.addr %s549, 4
        %s551 = smul.addr %s550, 4
        %s552 = scalar_lea.vmem %s3, %s551
        %p553 = scmp.lt.s32.totalorder %s31, 3
        %s554 = scalar_select %p553, %s31, 3
        %s555 = smul.addr %s554, 4
        %s556 = smul.addr %s555, 4
        %s557 = scalar_lea.vmem %s4, %s556
        %p558 = scmp.lt.s32.totalorder %s31, 3
        %s559 = scalar_select %p558, %s31, 3
        %s560 = smul.addr %s559, 4
        %s561 = smul.addr %s560, 4
        %s562 = scalar_lea.vmem %s5, %s561
        %p563 = scmp.lt.s32.totalorder %s31, 3
        %s564 = scalar_select %p563, %s31, 3
        %s565 = scalar_lea.vmem %s6, %s564
        %p566 = scmp.lt.s32.totalorder %s31, 3
        %s567 = scalar_select %p566, %s31, 3
        %s568 = scalar_lea.vmem %s7, %s567
        %p569 = scmp.lt.s32.totalorder %s31, 3
        %s570 = scalar_select %p569, %s31, 3
        %s571 = scalar_lea.vmem %s8, %s570
        %p572 = scmp.lt.s32.totalorder %s31, 3
        %s573 = scalar_select %p572, %s31, 3
        %s574 = smul.addr %s573, 4
        %s575 = scalar_lea.vmem %s9, %s574
        %p577 = scmp.eq.s32.totalorder %s31, 0
        %p578 = scmp.eq.s32.totalorder %s32, 0
        %p579 = pnand %p577, %p578
        %p580 = pneg %p579
        // Predicated region
        $region65: #{tpu_custom_call.1} parent=63 // pred_check
          _
        $region66: #{tpu_custom_call.1} parent=63 // pred_check_branch
          %582 = sbr.rel (%p579) target = $region68
        $region67: #{tpu_custom_call.1} parent=63 // pred_region
          %vm583 = vcmask 261120
          %584 = vst.msk [vmem:[#allocation6] sm:$0xff] %vm583, 0.0
        $region68: #{tpu_custom_call.1} parent=63 // pred_fallthru
          _
        // Predicated region
        $region69: #{tpu_custom_call.1} parent=63 // pred_check
          %p585 = pneg %p578
        $region70: #{tpu_custom_call.1} parent=63 // pred_check_branch
          %587 = sbr.rel (%p585) target = $region72
        $region71: #{tpu_custom_call.1} parent=63 // pred_region
          %v588 = vld [vmem:[%s533] sm:$0xff]
          %v589 = vpack.c.bf16 %v588, %v588
          %v590 = vld [vmem:[%s552] sm:$0xf]
          %v591 = vld [vmem:[%s552 + $0x4] sm:$0xf]
          %v592 = vld [vmem:[%s552 + $0x8] sm:$0xf]
          %v593 = vld [vmem:[%s552 + $0xc] sm:$0xf]
          %v594 = vld [vmem:[%s565] sm:$0x1]
          %v596 = vperm.slane %v594, 0
          %v602 = vunpack.c.l.b16 %v590
          %v603 = vunpack.c.l.b16 %v591
          %v604 = vunpack.c.l.b16 %v592
          %v605 = vunpack.c.l.b16 %v593
          %v606 = vpack.c.b16 %v603, %v602
          %v607 = vpack.c.b16 %v605, %v604
          %vm610 = vcmask 261120
          %v612 = vsel %vm610, %v589, 0
          %614 = vmatpush.bf16.msra.mxu0 0
          %615 = vmatpush.bf16.msra.mxu0 0
          %616 = vmatpush.bf16.msra.mxu0 0
          %617 = vmatpush.bf16.msra.mxu0 0
          %618 = vmatpush.bf16.msra.mxu0 0
          %619 = vmatpush.bf16.msra.mxu0 0
          %620 = vmatpush.bf16.msra.mxu0 %v607
          %621 = vmatpush.bf16.msra.mxu0 %v606
          %622 = vmatmul.bf16.gmra.mxu0 %v612
          %v623 = vpop.f32.mrf.mxu0
          %v624 = vadd.f32 %v596, %v623
          %v625 = vpop.f32.mrf.mxu0
          %626 = vdwg.mxu0
          %v627 = vmul.f32 %v624, 0.35355338
          %v628 = vpack.c.bf16 %v627, %v627
          %vm629 = vcmask 60416
          %630 = vst.msk [vmem:[#allocation2] sm:$0xf] %vm629, %v628
          %vm631 = vcmask 7168
          %632 = vst.msk [vmem:[#allocation3] sm:$0xff] %vm631, -inf
          %633 = vst.msk [vmem:[#allocation4] sm:$0xff] %vm631, 0.0
          %vm634 = vcmask 64512
          %635 = vst.msk [vmem:[#allocation5] sm:$0xff] %vm634, 0.0
        $region72: #{tpu_custom_call.1} parent=63 // pred_fallthru
          _
        %v636 = vld [vmem:[%s540] sm:$0xff]
        %v637 = vpack.c.bf16 %v636, %v636
        %v638 = vld [vmem:[%s547] sm:$0xff]
        %v639 = vpack.c.bf16 %v638, %v638
        %v640 = vld [vmem:[%s557] sm:$0xf]
        %v641 = vld [vmem:[%s557 + $0x4] sm:$0xf]
        %v642 = vld [vmem:[%s557 + $0x8] sm:$0xf]
        %v643 = vld [vmem:[%s557 + $0xc] sm:$0xf]
        %v644 = vld [vmem:[%s568] sm:$0x1]
        %v646 = vperm.slane %v644, 0
        %v652 = vunpack.c.l.b16 %v640
        %v653 = vunpack.c.l.b16 %v641
        %v654 = vunpack.c.l.b16 %v642
        %v655 = vunpack.c.l.b16 %v643
        %v656 = vpack.c.b16 %v653, %v652
        %v657 = vpack.c.b16 %v655, %v654
        %vm660 = vcmask 261120
        %v662 = vsel %vm660, %v637, 0
        %664 = vmatpush.bf16.msra.mxu0 0
        %665 = vmatpush.bf16.msra.mxu0 0
        %666 = vmatpush.bf16.msra.mxu0 0
        %667 = vmatpush.bf16.msra.mxu0 0
        %668 = vmatpush.bf16.msra.mxu0 0
        %669 = vmatpush.bf16.msra.mxu0 0
        %670 = vmatpush.bf16.msra.mxu0 %v657
        %671 = vmatpush.bf16.msra.mxu0 %v656
        %672 = vmatmul.bf16.gmra.mxu0 %v662
        %v673 = vpop.f32.mrf.mxu0
        %v674 = vadd.f32 %v646, %v673
        %v675 = vpop.f32.mrf.mxu0
        %676 = vdwg.mxu0
        %v677 = vpack.c.bf16 %v674, %v674
        %v678 = vld [vmem:[%s562] sm:$0xf]
        %v679 = vld [vmem:[%s562 + $0x4] sm:$0xf]
        %v680 = vld [vmem:[%s562 + $0x8] sm:$0xf]
        %v681 = vld [vmem:[%s562 + $0xc] sm:$0xf]
        %v682 = vld [vmem:[%s571] sm:$0x1]
        %v684 = vperm.slane %v682, 0
        %v690 = vunpack.c.l.b16 %v678
        %v691 = vunpack.c.l.b16 %v679
        %v692 = vunpack.c.l.b16 %v680
        %v693 = vunpack.c.l.b16 %v681
        %v694 = vpack.c.b16 %v691, %v690
        %v695 = vpack.c.b16 %v693, %v692
        %v699 = vsel %vm660, %v639, 0
        %701 = vmatpush.bf16.msra.mxu0 0
        %702 = vmatpush.bf16.msra.mxu0 0
        %703 = vmatpush.bf16.msra.mxu0 0
        %704 = vmatpush.bf16.msra.mxu0 0
        %705 = vmatpush.bf16.msra.mxu0 0
        %706 = vmatpush.bf16.msra.mxu0 0
        %707 = vmatpush.bf16.msra.mxu0 %v695
        %708 = vmatpush.bf16.msra.mxu0 %v694
        %709 = vmatmul.bf16.gmra.mxu0 %v699
        %v710 = vpop.f32.mrf.mxu0
        %v711 = vadd.f32 %v684, %v710
        %v712 = vpop.f32.mrf.mxu0
        %713 = vdwg.mxu0
        %v714 = vpack.c.bf16 %v711, %v711
        %v715 = vld [vmem:[#allocation2] sm:$0xf]
        %vm716 = vcmask 64512
        %v718 = vsel %vm716, %v715, 0
        %v721 = vsel %vm716, %v677, 0
        %723 = vmatpush.bf16.xpose.msra.mxu0 0
        %724 = vmatpush.bf16.xpose.msra.mxu0 0
        %725 = vmatpush.bf16.xpose.msra.mxu0 0
        %726 = vmatpush.bf16.xpose.msra.mxu0 0
        %727 = vmatpush.bf16.xpose.msra.mxu0 0
        %728 = vmatpush.bf16.xpose.msra.mxu0 0
        %729 = vmatpush.bf16.xpose.msra.mxu0 0
        %730 = vmatpush.bf16.xpose.msra.mxu0 %v721
        %731 = vmatmul.bf16.gmra.mxu0 %v718
        %v732 = vpop.f32.mrf.mxu0
        %v733 = vadd.f32 0.0, %v732
        %v734 = vpop.f32.mrf.mxu0
        %735 = vdwg.mxu0
        %v736 = vld [vmem:[#allocation3] sm:$0xff]
        %v737 = vsel %vm716, %v733, -inf
        %738 = vmax.xlane.f32.xlu0 %v737
        %v739 = vpop.xlane.xlu0 %738
        %v740 = vmax.f32 %v736, %v739
        %v741 = vsub.f32 %v736, %v740
        %v742 = vmul.f32 %v741, 1.442695
        %v743 = vpow.pop %v742
        %745 = vset.pattern.permute.xlu0 0
        %746 = vperm.xlu0 %745, %v740
        %v747 = vpop.permute.xlu0 %746
        %v749 = vsub.f32 %v733, %v747
        %v750 = vmul.f32 %v749, 1.442695
        %v751 = vpow.pop %v750
        %v752 = vld [vmem:[#allocation4] sm:$0xff]
        %v753 = vmul.f32 %v743, %v752
        %v754 = vsel %vm716, %v751, 0.0
        %755 = vadd.xlane.f32.xlu0 %v754
        %v756 = vpop.xlane.xlu0 %755
        %v757 = vadd.f32 %v753, %v756
        %vm758 = vcmask 7168
        %759 = vst.msk [vmem:[#allocation4] sm:$0xff] %vm758, %v757
        %v760 = vld [vmem:[#allocation5] sm:$0xff]
        %762 = vset.pattern.permute.xlu0 0
        %763 = vperm.xlu0 %762, %v743
        %v764 = vpop.permute.xlu0 %763
        %v766 = vmul.f32 %v764, %v760
        %v767 = vpack.c.bf16 %v751, %v751
        %v769 = vsel %vm716, %v767, 0
        %vm771 = vcmask 1043456
        %v773 = vsel %vm771, %v714, 0
        %775 = vmatpush.bf16.msra.mxu0 0
        %776 = vmatpush.bf16.msra.mxu0 0
        %777 = vmatpush.bf16.msra.mxu0 0
        %778 = vmatpush.bf16.msra.mxu0 0
        %779 = vmatpush.bf16.msra.mxu0 0
        %780 = vmatpush.bf16.msra.mxu0 0
        %781 = vmatpush.bf16.msra.mxu0 0
        %782 = vmatpush.bf16.msra.mxu0 %v773
        %783 = vmatmul.bf16.gmra.mxu0 %v769
        %v784 = vpop.f32.mrf.mxu0
        %v785 = vadd.f32 0.0, %v784
        %v786 = vpop.f32.mrf.mxu0
        %787 = vdwg.mxu0
        %v788 = vadd.f32 %v766, %v785
        %789 = vst.msk [vmem:[#allocation5] sm:$0xff] %vm716, %v788
        %790 = vst.msk [vmem:[#allocation3] sm:$0xff] %vm758, %v740
        // Predicated region
        $region73: #{tpu_custom_call.1} parent=63 // pred_check
          %p791 = pneg %p578
        $region74: #{tpu_custom_call.1} parent=63 // pred_check_branch
          %793 = sbr.rel (%p791) target = $region76
        $region75: #{tpu_custom_call.1} parent=63 // pred_region
          %v794 = vld [vmem:[#allocation5] sm:$0xff]
          %v795 = vld [vmem:[#allocation4] sm:$0xff]
          %v796 = vrcp.pop %v795
          %798 = vset.pattern.permute.xlu0 0
          %799 = vperm.xlu0 %798, %v796
          %v800 = vpop.permute.xlu0 %799
          %v802 = vmul.f32 %v794, %v800
          %v803 = vld [vmem:[#allocation6] sm:$0xff]
          %v804 = vpack.c.bf16 %v802, %v802
          %v805 = vld [vmem:[%s575] sm:$0xf]
          %v807 = vsel %vm716, %v804, 0
          %v810 = vsel %vm771, %v805, 0
          %812 = vmatpush.bf16.msra.mxu0 0
          %813 = vmatpush.bf16.msra.mxu0 0
          %814 = vmatpush.bf16.msra.mxu0 0
          %815 = vmatpush.bf16.msra.mxu0 0
          %816 = vmatpush.bf16.msra.mxu0 0
          %817 = vmatpush.bf16.msra.mxu0 0
          %818 = vmatpush.bf16.msra.mxu0 0
          %819 = vmatpush.bf16.msra.mxu0 %v810
          %820 = vmatmul.bf16.gmra.mxu0 %v807
          %v821 = vpop.f32.mrf.mxu0
          %v822 = vadd.f32 0.0, %v821
          %v823 = vpop.f32.mrf.mxu0
          %824 = vdwg.mxu0
          %v825 = vadd.f32 %v803, %v822
          %826 = vst.msk [vmem:[#allocation6] sm:$0xff] %vm660, %v825
        $region76: #{tpu_custom_call.1} parent=63 // pred_fallthru
          _
        %p827 = scmp.eq.s32.totalorder %s31, 3
        %p828 = pnand %p827, %p578
        %p829 = pneg %p828
        // Predicated region
        $region77: #{tpu_custom_call.1} parent=63 // pred_check
          _
        $region78: #{tpu_custom_call.1} parent=63 // pred_check_branch
          %831 = sbr.rel (%p828) target = $region80
        $region79: #{tpu_custom_call.1} parent=63 // pred_region
          %v832 = vld [vmem:[#allocation6] sm:$0xff]
          %v833 = vld [vmem:[%s10] sm:$0x1]
          %v835 = vperm.slane %v833, 0
          %v837 = vadd.f32 %v832, %v835
          %838 = vst.msk [vmem:[%s529] sm:$0xff] %vm660, %v837
        $region80: #{tpu_custom_call.1} parent=63 // pred_fallthru
          _
        %s839 = sand.u32 %s337, 1
        %s840 = scalar_lea.sflag [#allocation8], %s839
        %s841 = sand.u32 %s337, 1
        %s842 = smul.addr %s841, 8
        %s843 = scalar_lea.vmem [#allocation7], %s842
        // Predicated region
        $region81: #{tpu_custom_call.1} parent=63 // pred_check
          %p844 = pneg %p347
        $region82: #{tpu_custom_call.1} parent=63 // pred_check_branch
          %846 = sbr.rel (%p844) target = $region84
        $region83: #{tpu_custom_call.1} parent=63 // pred_region
          %848 = vsyncadd %s840, 0
          %s849 = smul.addr %s30, 8
          %s850 = scalar_lea.hbm %s11, %s849
          %s852 = sshll.u32 %s843, 4
          %s853 = int_to_ptr.vmem [resolvable:$true] %s852
          %s854 = sshll.u32 %s850, 4
          %s855 = int_to_ptr.hbm [resolvable:$true] %s854
          %857 = dma.vmem_to_hbm [thread:$0]  %s853, 128, %s855, %s840
        $region84: #{tpu_custom_call.1} parent=63 // pred_fallthru
          _
      $region64: #{tpu_custom_call.1} parent=5 // pred_fallthru
        _
      %p858 = scmp.le.s32.totalorder 2, %s20
      // Predicated region
      $region85: #{tpu_custom_call.1} parent=5 // pred_check
        %p859 = pneg %p858
      $region86: #{tpu_custom_call.1} parent=5 // pred_check_branch
        %861 = sbr.rel (%p859) target = $region88
      $region87: #{tpu_custom_call.1} parent=5 // pred_region
        %s862 = ssub.s32 %s20, 2
        // Predicated region
        $region89: #{tpu_custom_call.1} parent=87 // pred_check
          %p863 = pneg %p353
        $region90: #{tpu_custom_call.1} parent=87 // pred_check_branch
          %865 = sbr.rel (%p863) target = $region92
        $region91: #{tpu_custom_call.1} parent=87 // pred_region
          %s866 = sand.u32 %s338, 1
          %s867 = scalar_lea.sflag [#allocation8], %s866
          %s868 = sand.u32 %s338, 1
          %s869 = smul.addr %s868, 8
          %s870 = scalar_lea.vmem [#allocation7], %s869
          %872 = dma.done %s867, 128
        $region92: #{tpu_custom_call.1} parent=87 // pred_fallthru
          _
      $region88: #{tpu_custom_call.1} parent=5 // pred_fallthru
        _
    $region6: #{tpu_custom_call.1} parent=1 // loop_footer
      %s24 = sadd.s32 1, %s20
    $region7: #{tpu_custom_call.1} parent=1 // loop_footer_branch
      %19 = sbr.rel target = $region3
    $region8: #{tpu_custom_call.1} parent=1 // loop_exit
      _
    %873 = vsyncpa [#allocation8], 1
    %s874 = scalar_lea.sflag [#allocation8], 1
    %875 = vsyncpa %s874, 1

</llo_original>
